<compile_context>
chip_gen: v6e
topology: v6e:2x2x1
jax: 0.10.0
libtpu: 0.0.40
codegen_flags: <defaults>
</compile_context>

<pallas_src>
import functools

import jax
import jax.numpy as jnp
from jax.experimental import pallas as pl
from jax.experimental.pallas import tpu as pltpu

_GELU_C = 0.7978845608028654  # sqrt(2/pi)

# NOTE: the PyTorch reference uses the custom GELU() class from the
# LLM-from-scratch codebase, which is the tanh approximation:
#   0.5*x*(1 + tanh(sqrt(2/pi)*(x + 0.044715*x^3)))
# This kernel matches that (NOT the erf-based nn.GELU default).


# ----------------------------------------------------------------------------
# Kernels
# ----------------------------------------------------------------------------
def _gelu_f32(h):
    # h is f32; tanh argument folded as h*(1 + 0.044715*h*h) to save a multiply.
    inner = h * (1.0 + 0.044715 * (h * h))
    return 0.5 * h * (1.0 + jnp.tanh(_GELU_C * inner))


def _ffn_resident_kernel(x_ref, w1_ref, b1_ref, w2_ref, b2_ref, o_ref):
    # Weights fully resident in VMEM; one token tile per grid step.
    h = jnp.dot(x_ref[...], w1_ref[...], preferred_element_type=jnp.float32)
    h = h + b1_ref[...].astype(jnp.float32)
    g = _gelu_f32(h).astype(w2_ref.dtype)  # back to native dtype for the MXU
    out = jnp.dot(g, w2_ref[...], preferred_element_type=jnp.float32)
    o_ref[...] = (out + b2_ref[...].astype(jnp.float32)).astype(o_ref.dtype)


def _ffn_stream_kernel(x_ref, w1_ref, b1_ref, w2_ref, b2_ref, o_ref, acc_ref):
    # x_ref  : (tm, D)   token tile (resident across the H axis)
    # w1_ref : (D, th)   chunk of first linear weight
    # b1_ref : (1, th)
    # w2_ref : (th, D)   chunk of second linear weight
    # b2_ref : (1, D)
    # o_ref  : (tm, D)
    # acc_ref: (tm, D)   f32 accumulator (resident across the H axis)
    hj = pl.program_id(1)

    @pl.when(hj == 0)
    def _():
        acc_ref[...] = jnp.zeros_like(acc_ref)

    h = jnp.dot(x_ref[...], w1_ref[...], preferred_element_type=jnp.float32)
    h = h + b1_ref[...].astype(jnp.float32)
    g = _gelu_f32(h).astype(w2_ref.dtype)
    acc_ref[...] += jnp.dot(g, w2_ref[...], preferred_element_type=jnp.float32)

    @pl.when(hj == pl.num_programs(1) - 1)
    def _():
        o_ref[...] = (acc_ref[...] + b2_ref[...].astype(jnp.float32)
                      ).astype(o_ref.dtype)


# ----------------------------------------------------------------------------
# pallas_call wrappers
# ----------------------------------------------------------------------------
@functools.partial(jax.jit, static_argnames=("tm", "th", "resident", "vmem_limit"))
def _ffn_call(x2, w1, b1r, w2, b2r, *, tm, th, resident, vmem_limit):
    Np, D = x2.shape
    H = w1.shape[1]
    n_tok_tiles = Np // tm

    w_bytes = (w1.size * w1.dtype.itemsize + w2.size * w2.dtype.itemsize
               + b1r.size * b1r.dtype.itemsize + b2r.size * b2r.dtype.itemsize)
    act_bytes = 2 * Np * D * x2.dtype.itemsize          # read x, write out
    weight_passes = 1 if resident else n_tok_tiles       # real weight traffic
    cost = pl.CostEstimate(
        flops=4 * Np * D * H,                             # two matmuls
        transcendentals=Np * H,                           # tanh
        bytes_accessed=act_bytes + weight_passes * w_bytes,
    )

    if resident:
        cparams = pltpu.CompilerParams(
            dimension_semantics=("parallel",),
            vmem_limit_bytes=vmem_limit)
        return pl.pallas_call(
            _ffn_resident_kernel,
            out_shape=jax.ShapeDtypeStruct((Np, D), x2.dtype),
            grid_spec=pltpu.PrefetchScalarGridSpec(
                num_scalar_prefetch=0,
                grid=(n_tok_tiles,),
                in_specs=[
                    pl.BlockSpec((tm, D), lambda i: (i, 0)),   # x tile
                    pl.BlockSpec((D, H), lambda i: (0, 0)),    # W1 (resident)
                    pl.BlockSpec((1, H), lambda i: (0, 0)),    # b1
                    pl.BlockSpec((H, D), lambda i: (0, 0)),    # W2 (resident)
                    pl.BlockSpec((1, D), lambda i: (0, 0)),    # b2
                ],
                out_specs=pl.BlockSpec((tm, D), lambda i: (i, 0)),
            ),
            compiler_params=cparams,
            cost_estimate=cost,
        )(x2, w1, b1r, w2, b2r)

    cparams = pltpu.CompilerParams(
        dimension_semantics=("parallel", "arbitrary"),
        vmem_limit_bytes=vmem_limit)
    return pl.pallas_call(
        _ffn_stream_kernel,
        out_shape=jax.ShapeDtypeStruct((Np, D), x2.dtype),
        grid_spec=pltpu.PrefetchScalarGridSpec(
            num_scalar_prefetch=0,
            grid=(n_tok_tiles, H // th),
            in_specs=[
                pl.BlockSpec((tm, D), lambda i, j: (i, 0)),    # x tile
                pl.BlockSpec((D, th), lambda i, j: (0, j)),    # W1 chunk
                pl.BlockSpec((1, th), lambda i, j: (0, j)),    # b1 chunk
                pl.BlockSpec((th, D), lambda i, j: (j, 0)),    # W2 chunk
                pl.BlockSpec((1, D), lambda i, j: (0, 0)),     # b2
            ],
            out_specs=pl.BlockSpec((tm, D), lambda i, j: (i, 0)),
            scratch_shapes=[pltpu.VMEM((tm, D), jnp.float32)],
        ),
        compiler_params=cparams,
        cost_estimate=cost,
    )(x2, w1, b1r, w2, b2r)


# ----------------------------------------------------------------------------
# Host-side tile / variant selection
# ----------------------------------------------------------------------------
def _vmem_capacity_bytes():
    try:
        info = pltpu.get_tpu_info()
        cap = getattr(info, "vmem_capacity_bytes", None)
        if cap:
            return int(cap)
    except Exception:
        pass
    return 64 * 1024 * 1024  # conservative fallback (v7x per-TC VMEM)


def _token_tile_bytes(tm, D, x_isz):
    # double-buffered x + out tiles, plus the f32 accumulator
    return 2 * tm * D * x_isz + 2 * tm * D * x_isz + tm * D * 4


def _resident_bytes(tm, D, H, x_isz, w_isz):
    weights = 2 * (D * H + H * D + H + D) * w_isz    # conservatively 2-buffered
    tiles = 2 * 2 * tm * D * x_isz                   # x + out, double-buffered
    interm = tm * H * 4                              # f32 GELU intermediate
    return weights + tiles + interm


def _stream_bytes(tm, th, D, x_isz, w_isz):
    weights = 2 * (D * th + th * D + th + D) * w_isz
    interm = tm * th * 4
    return _token_tile_bytes(tm, D, x_isz) + weights + interm


def feed_forward(x, w1, b1, w2, b2, *, vmem_cap_bytes=None, force_stream=False):
    """FeedForward: GELU(tanh)(x @ w1 + b1) @ w2 + b2.

    x: (B, T, D); w1: (D, 4D); b1: (4D,); w2: (4D, D); b2: (D,).
    For best throughput supply bf16 weights/activations (f32 halves MXU rate
    and doubles weight HBM bytes).  D should be a multiple of 128 for
    lane-dense stores in production shapes.
    """
    B, T, D = x.shape
    H = w1.shape[1]
    N = B * T

    if vmem_cap_bytes is None:
        vmem_cap_bytes = _vmem_capacity_bytes()
    budget = int(vmem_cap_bytes * 0.75)
    vmem_limit = max(32 * 1024 * 1024,
                     min(int(vmem_cap_bytes * 0.9), 100 * 1024 * 1024))

    x_isz = x.dtype.itemsize
    w_isz = w1.dtype.itemsize

    # --- token tile: >= 256 whenever N allows, pad N up to a multiple of tm.
    # Never accept tiny exact divisors (they make the kernel HBM-bound on the
    # weight stream).  Keep at least 2 token tiles so the "parallel" axis can
    # split across TensorCores (v7x megacore).
    if N >= 1024:
        tm = 512
    elif N >= 256:
        tm = 256
    else:
        tm = ((N + 7) // 8) * 8          # tiny N: single full-extent tile
    while tm > 256 and _token_tile_bytes(tm, D, x_isz) > budget // 2:
        tm //= 2

    x2 = x.reshape(N, D)
    Np = ((N + tm - 1) // tm) * tm
    if Np != N:
        x2 = jnp.pad(x2, ((0, Np - N), (0, 0)))

    # --- variant selection: weights fully resident when they fit in VMEM.
    resident = (not force_stream) and (
        _resident_bytes(tm, D, H, x_isz, w_isz) <= budget)

    if resident:
        th = H  # unused by the resident kernel
    else:
        # Hidden-dim tile: largest of (1024, 512, 256) that divides H and fits
        # the VMEM budget; 128 only as a last-resort fallback (underfills the
        # 256-wide MXU on v6e/v7x); full H if nothing divides.
        th = None
        for cand in (1024, 512, 256, 128):
            if H % cand == 0 and _stream_bytes(tm, cand, D, x_isz, w_isz) <= budget:
                th = cand
                break
        if th is None:
            for cand in (128, 256, 512, 1024):
                if H % cand == 0:
                    th = cand
                    break
        if th is None:
            th = H

    b1r = b1.reshape(1, H)
    b2r = b2.reshape(1, D)

    out = _ffn_call(x2, w1, b1r, w2, b2r,
                    tm=tm, th=th, resident=resident, vmem_limit=vmem_limit)
    return out[:N].reshape(B, T, D)


# ----------------------------------------------------------------------------
# Reference + tests
# ----------------------------------------------------------------------------
def _gelu_tanh(x):
    return 0.5 * x * (1.0 + jnp.tanh(_GELU_C * (x + 0.044715 * x ** 3)))


if __name__ == "__main__":
    key = jax.random.PRNGKey(0)

    # --- Test 1: module-sized f32 check (cfg['emb_dim']=32, batch=2, seq=8) ---
    emb_dim, batch, seq = 32, 2, 8
    hidden = 4 * emb_dim
    kx, k1, k2, k3, k4, kbig = jax.random.split(key, 6)

    x = jax.random.normal(kx, (batch, seq, emb_dim), dtype=jnp.float32)
    w1 = jax.random.normal(k1, (emb_dim, hidden), dtype=jnp.float32) * (emb_dim ** -0.5)
    b1 = jax.random.normal(k2, (hidden,), dtype=jnp.float32) * 0.01
    w2 = jax.random.normal(k3, (hidden, emb_dim), dtype=jnp.float32) * (hidden ** -0.5)
    b2 = jax.random.normal(k4, (emb_dim,), dtype=jnp.float32) * 0.01

    out = jax.block_until_ready(feed_forward(x, w1, b1, w2, b2))
    ref = _gelu_tanh(x @ w1 + b1) @ w2 + b2
    assert out.shape == (batch, seq, emb_dim)
    assert jnp.allclose(out, ref, atol=1e-4, rtol=1e-4), "f32 mismatch vs reference"

    # --- Test 2: lane-dense bf16, weights-resident path (D=256, H=1024) -------
    D2, B2, T2 = 256, 2, 256
    H2 = 4 * D2
    kx2, k5, k6, k7, k8 = jax.random.split(kbig, 5)
    xb = jax.random.normal(kx2, (B2, T2, D2), dtype=jnp.float32).astype(jnp.bfloat16)
    w1b = (jax.random.normal(k5, (D2, H2), dtype=jnp.float32) * (D2 ** -0.5)).astype(jnp.bfloat16)
    b1b = (jax.random.normal(k6, (H2,), dtype=jnp.float32) * 0.01).astype(jnp.bfloat16)
    w2b = (jax.random.normal(k7, (H2, D2), dtype=jnp.float32) * (H2 ** -0.5)).astype(jnp.bfloat16)
    b2b = (jax.random.normal(k8, (D2,), dtype=jnp.float32) * 0.01).astype(jnp.bfloat16)

    hf = xb.astype(jnp.float32) @ w1b.astype(jnp.float32) + b1b.astype(jnp.float32)
    gf = _gelu_tanh(hf).astype(jnp.bfloat16).astype(jnp.float32)
    ref_b = gf @ w2b.astype(jnp.float32) + b2b.astype(jnp.float32)

    out_b = jax.block_until_ready(feed_forward(xb, w1b, b1b, w2b, b2b))
    assert out_b.shape == (B2, T2, D2)
    assert jnp.allclose(out_b.astype(jnp.float32), ref_b, atol=5e-2, rtol=5e-2), \
        "bf16 resident-variant mismatch vs reference"

    # --- Test 3: same inputs, streamed (H-tiled accumulator) path --------------
    out_s = jax.block_until_ready(
        feed_forward(xb, w1b, b1b, w2b, b2b,
                     force_stream=True, vmem_cap_bytes=4 * 1024 * 1024))
    assert jnp.allclose(out_s.astype(jnp.float32), ref_b, atol=5e-2, rtol=5e-2), \
        "bf16 streamed-variant mismatch vs reference"

    print("KERNEL_OK")
</pallas_src>

<mosaic_0001>
module attributes {stable_mosaic.version = 11 : i64} {
  func.func @_ffn_resident_kernel(%arg0: i32, %arg1: memref<16x32xf32, #tpu.memory_space<vmem>>, %arg2: memref<32x128xf32, #tpu.memory_space<vmem>>, %arg3: memref<1x128xf32, #tpu.memory_space<vmem>>, %arg4: memref<128x32xf32, #tpu.memory_space<vmem>>, %arg5: memref<1x32xf32, #tpu.memory_space<vmem>>, %arg6: memref<16x32xf32, #tpu.memory_space<vmem>>) attributes {dimension_semantics = [#tpu.dimension_semantics<parallel>], iteration_bounds = array<i64: 1>, scalar_prefetch = 0 : i64, scratch_operands = 0 : i64, tpu.core_type = #tpu.core_type<tc>, window_params = [{transform_indices = @transform_0, window_bounds = array<i64: 16, 32>}, {pipeline_mode = #tpu.pipeline_mode<synchronous>, transform_indices = @transform_1, window_bounds = array<i64: 32, 128>}, {pipeline_mode = #tpu.pipeline_mode<synchronous>, transform_indices = @transform_2, window_bounds = array<i64: 1, 128>}, {pipeline_mode = #tpu.pipeline_mode<synchronous>, transform_indices = @transform_3, window_bounds = array<i64: 128, 32>}, {pipeline_mode = #tpu.pipeline_mode<synchronous>, transform_indices = @transform_4, window_bounds = array<i64: 1, 32>}, {transform_indices = @transform_5, window_bounds = array<i64: 16, 32>}]} {
    %c0 = arith.constant 0 : index
    %c0_0 = arith.constant 0 : index
    %0 = vector.load %arg1[%c0, %c0_0] : memref<16x32xf32, #tpu.memory_space<vmem>>, vector<16x32xf32>
    %c0_1 = arith.constant 0 : index
    %c0_2 = arith.constant 0 : index
    %1 = vector.load %arg2[%c0_1, %c0_2] : memref<32x128xf32, #tpu.memory_space<vmem>>, vector<32x128xf32>
    %cst = arith.constant dense<0.000000e+00> : vector<16x128xf32>
    %2 = tpu.matmul %0, %1, %cst {dimension_numbers = #tpu.dot_dimension_numbers<[1], [0], [0], [1], [0, 0, 1, 1], [], []>} : vector<16x32xf32>, vector<32x128xf32>, vector<16x128xf32> -> vector<16x128xf32>
    %c0_3 = arith.constant 0 : index
    %c0_4 = arith.constant 0 : index
    %3 = vector.load %arg3[%c0_3, %c0_4] : memref<1x128xf32, #tpu.memory_space<vmem>>, vector<1x128xf32>
    %4 = vector.broadcast %3 : vector<1x128xf32> to vector<16x128xf32>
    %5 = arith.addf %2, %4 : vector<16x128xf32>
    %6 = arith.mulf %5, %5 : vector<16x128xf32>
    %cst_5 = arith.constant 4.471500e-02 : f32
    %7 = vector.broadcast %cst_5 : f32 to vector<16x128xf32>
    %8 = arith.mulf %7, %6 : vector<16x128xf32>
    %cst_6 = arith.constant 1.000000e+00 : f32
    %9 = vector.broadcast %cst_6 : f32 to vector<16x128xf32>
    %10 = arith.addf %9, %8 : vector<16x128xf32>
    %11 = arith.mulf %5, %10 : vector<16x128xf32>
    %cst_7 = arith.constant 5.000000e-01 : f32
    %12 = vector.broadcast %cst_7 : f32 to vector<16x128xf32>
    %13 = arith.mulf %12, %5 : vector<16x128xf32>
    %cst_8 = arith.constant 0.797884583 : f32
    %14 = vector.broadcast %cst_8 : f32 to vector<16x128xf32>
    %15 = arith.mulf %14, %11 : vector<16x128xf32>
    %16 = math.tanh %15 : vector<16x128xf32>
    %cst_9 = arith.constant 1.000000e+00 : f32
    %17 = vector.broadcast %cst_9 : f32 to vector<16x128xf32>
    %18 = arith.addf %17, %16 : vector<16x128xf32>
    %19 = arith.mulf %13, %18 : vector<16x128xf32>
    %c0_10 = arith.constant 0 : index
    %c0_11 = arith.constant 0 : index
    %20 = vector.load %arg4[%c0_10, %c0_11] : memref<128x32xf32, #tpu.memory_space<vmem>>, vector<128x32xf32>
    %cst_12 = arith.constant dense<0.000000e+00> : vector<16x32xf32>
    %21 = tpu.matmul %19, %20, %cst_12 {dimension_numbers = #tpu.dot_dimension_numbers<[1], [0], [0], [1], [0, 0, 1, 1], [], []>} : vector<16x128xf32>, vector<128x32xf32>, vector<16x32xf32> -> vector<16x32xf32>
    %c0_13 = arith.constant 0 : index
    %c0_14 = arith.constant 0 : index
    %22 = vector.load %arg5[%c0_13, %c0_14] : memref<1x32xf32, #tpu.memory_space<vmem>>, vector<1x32xf32>
    %23 = vector.broadcast %22 : vector<1x32xf32> to vector<16x32xf32>
    %24 = arith.addf %21, %23 : vector<16x32xf32>
    %c0_15 = arith.constant 0 : index
    %c0_16 = arith.constant 0 : index
    %25 = vector.load %arg6[%c0_15, %c0_16] : memref<16x32xf32, #tpu.memory_space<vmem>>, vector<16x32xf32>
    tpu.vector_store %arg6[%c0_15, %c0_16], %24 {strides = array<i32>} : memref<16x32xf32, #tpu.memory_space<vmem>>, vector<16x32xf32>,
    return
  }
  func.func @transform_0(%arg0: i32) -> (i32, i32) {
    %c0_i32 = arith.constant 0 : i32
    %c0_i32_0 = arith.constant 0 : i32
    return %arg0, %c0_i32 : i32, i32
  }
  func.func @transform_1(%arg0: i32) -> (i32, i32) {
    %c0_i32 = arith.constant 0 : i32
    %c0_i32_0 = arith.constant 0 : i32
    %c0_i32_1 = arith.constant 0 : i32
    return %c0_i32, %c0_i32_0 : i32, i32
  }
  func.func @transform_2(%arg0: i32) -> (i32, i32) {
    %c0_i32 = arith.constant 0 : i32
    %c0_i32_0 = arith.constant 0 : i32
    %c0_i32_1 = arith.constant 0 : i32
    return %c0_i32, %c0_i32_0 : i32, i32
  }
  func.func @transform_3(%arg0: i32) -> (i32, i32) {
    %c0_i32 = arith.constant 0 : i32
    %c0_i32_0 = arith.constant 0 : i32
    %c0_i32_1 = arith.constant 0 : i32
    return %c0_i32, %c0_i32_0 : i32, i32
  }
  func.func @transform_4(%arg0: i32) -> (i32, i32) {
    %c0_i32 = arith.constant 0 : i32
    %c0_i32_0 = arith.constant 0 : i32
    %c0_i32_1 = arith.constant 0 : i32
    return %c0_i32, %c0_i32_0 : i32, i32
  }
  func.func @transform_5(%arg0: i32) -> (i32, i32) {
    %c0_i32 = arith.constant 0 : i32
    %c0_i32_0 = arith.constant 0 : i32
    return %arg0, %c0_i32 : i32, i32
  }
}

</mosaic_0001>

<llo_original>
// kernel: _ffn_call.1
$region0: #{_ffn_call.1}
  #allocation0 [shape = 'u32[]', space=smem, size = 0x4, offset = 0x4, fixed_abs, tag = 'smem constant byte address 0x4 - core index']
  #allocation1 [shape = 'u32[144,128]{1,0:T(1,128)}', space=vmem, size = 0x12000, scoped, tag = 'internal scratch']
  %s0 = inlined_call_operand.vmem [shape: f32[16,32], index: 0, kind: input, shape index: {}]
  %s1 = inlined_call_operand.vmem [shape: f32[32,128], index: 1, kind: input, shape index: {}]
  %s2 = inlined_call_operand.vmem [shape: f32[1,128], index: 2, kind: input, shape index: {}]
  %s3 = inlined_call_operand.vmem [shape: f32[128,32], index: 3, kind: input, shape index: {}]
  %s4 = inlined_call_operand.vmem [shape: f32[1,32], index: 4, kind: input, shape index: {}]
  %s5 = inlined_call_operand.hbm [shape: f32[16,32], index: 5, kind: output, shape index: {}]
  %s6 = sld [smem:[#allocation0]]
  $region30: #{_ffn_call.1} parent=0
    _
  %s8 = ssub.s32 1, %s6
  %s9 = scalar_select 0, %s8, %s6
  $region1: #{_ffn_call.1} parent=0
    #allocation2 [shape = 'u8[8192]{0}', space=vmem, size = 0x2000, scoped, tag = 'output window, operand 0, single buffered']
    #allocation3 [shape = 's32[1]{0}', space=sflag, size = 0x4, scoped, tag = 'scoped memory for _ffn_call.1']
    %10 = vsyncpa [#allocation3], 0
    // Predicated region
    $region2: #{_ffn_call.1} parent=1 // pred_check
      _
    $region3: #{_ffn_call.1} parent=1 // pred_check_branch
      %12 = sbr.rel (0) target = $region5
    $region4: #{_ffn_call.1} parent=1 // pred_region
      _
    $region5: #{_ffn_call.1} parent=1 // pred_fallthru
      _
    // Predicated region
    $region6: #{_ffn_call.1} parent=1 // pred_check
      _
    $region7: #{_ffn_call.1} parent=1 // pred_check_branch
      %14 = sbr.rel (0) target = $region9
    $region8: #{_ffn_call.1} parent=1 // pred_region
      _
    $region9: #{_ffn_call.1} parent=1 // pred_fallthru
      _
    // Predicated region
    $region10: #{_ffn_call.1} parent=1 // pred_check
      _
    $region11: #{_ffn_call.1} parent=1 // pred_check_branch
      %16 = sbr.rel (0) target = $region13
    $region12: #{_ffn_call.1} parent=1 // pred_region
      _
    $region13: #{_ffn_call.1} parent=1 // pred_fallthru
      _
    // Predicated region
    $region14: #{_ffn_call.1} parent=1 // pred_check
      _
    $region15: #{_ffn_call.1} parent=1 // pred_check_branch
      %18 = sbr.rel (0) target = $region17
    $region16: #{_ffn_call.1} parent=1 // pred_region
      _
    $region17: #{_ffn_call.1} parent=1 // pred_fallthru
      _
    // Predicated region
    $region18: #{_ffn_call.1} parent=1 // pred_check
      _
    $region19: #{_ffn_call.1} parent=1 // pred_check_branch
      %20 = sbr.rel (0) target = $region21
    $region20: #{_ffn_call.1} parent=1 // pred_region
      _
    $region21: #{_ffn_call.1} parent=1 // pred_fallthru
      _
    %v21 = vld [vmem:[%s0] sm:$0xff]
    %v22 = vld [vmem:[%s0 + $0x8] sm:$0xff]
    %v23 = vld [vmem:[%s1] sm:$0xff]
    %v24 = vld [vmem:[%s1 + $0x8] sm:$0xff]
    %v25 = vld [vmem:[%s1 + $0x10] sm:$0xff]
    %v26 = vld [vmem:[%s1 + $0x18] sm:$0xff]
    %v27 = vld [vmem:[%s2] sm:$0x1]
    %v29 = vlaneseq
    %v30 = vshrl.u32 %v29, 7
    %v31 = vsub.s32 0, %v30
    %v32 = vrot.slane %v27, %v31
    %vm34 = vcmask 261120
    %v36 = vsel %vm34, %v21, 0
    %v39 = vsel %vm34, %v22, 0
    %41 = vmatprep.subr.mxu0 0.0
    %42 = vmatpush1.msra.mxu0 0.0
    %43 = vmatprep.subr.mxu0 0.0
    %44 = vmatpush1.msra.mxu0 0.0
    %45 = vmatprep.subr.mxu0 0.0
    %46 = vmatpush1.msra.mxu0 0.0
    %47 = vmatprep.subr.mxu0 0.0
    %48 = vmatpush1.msra.mxu0 0.0
    %49 = vmatprep.subr.mxu0 0.0
    %50 = vmatpush1.msra.mxu0 0.0
    %51 = vmatprep.subr.mxu0 0.0
    %52 = vmatpush1.msra.mxu0 0.0
    %53 = vmatprep.subr.mxu0 0.0
    %54 = vmatpush1.msra.mxu0 0.0
    %55 = vmatprep.subr.mxu0 0.0
    %56 = vmatpush1.msra.mxu0 0.0
    %57 = vmatprep.subr.mxu0 0.0
    %58 = vmatpush1.msra.mxu0 0.0
    %59 = vmatprep.subr.mxu0 0.0
    %60 = vmatpush1.msra.mxu0 0.0
    %61 = vmatprep.subr.mxu0 0.0
    %62 = vmatpush1.msra.mxu0 0.0
    %63 = vmatprep.subr.mxu0 0.0
    %64 = vmatpush1.msra.mxu0 0.0
    %65 = vmatprep.subr.mxu0 0.0
    %66 = vmatpush1.msra.mxu0 %v26
    %67 = vmatprep.subr.mxu0 0.0
    %68 = vmatpush1.msra.mxu0 %v25
    %69 = vmatprep.subr.mxu0 0.0
    %70 = vmatpush1.msra.mxu0 %v24
    %71 = vmatprep.subr.mxu0 0.0
    %72 = vmatpush1.msra.mxu0 %v23
    %73 = vmatprep.subr.mxu0 0.0
    %74 = vmatpush2.msra.mxu0 0.0
    %75 = vmatprep.subr.mxu0 0.0
    %76 = vmatpush2.msra.mxu0 0.0
    %77 = vmatprep.subr.mxu0 0.0
    %78 = vmatpush2.msra.mxu0 0.0
    %79 = vmatprep.subr.mxu0 0.0
    %80 = vmatpush2.msra.mxu0 0.0
    %81 = vmatprep.subr.mxu0 0.0
    %82 = vmatpush2.msra.mxu0 0.0
    %83 = vmatprep.subr.mxu0 0.0
    %84 = vmatpush2.msra.mxu0 0.0
    %85 = vmatprep.subr.mxu0 0.0
    %86 = vmatpush2.msra.mxu0 0.0
    %87 = vmatprep.subr.mxu0 0.0
    %88 = vmatpush2.msra.mxu0 0.0
    %89 = vmatprep.subr.mxu0 0.0
    %90 = vmatpush2.msra.mxu0 0.0
    %91 = vmatprep.subr.mxu0 0.0
    %92 = vmatpush2.msra.mxu0 0.0
    %93 = vmatprep.subr.mxu0 0.0
    %94 = vmatpush2.msra.mxu0 0.0
    %95 = vmatprep.subr.mxu0 0.0
    %96 = vmatpush2.msra.mxu0 0.0
    %97 = vmatprep.subr.mxu0 0.0
    %98 = vmatpush2.msra.mxu0 0.0
    %99 = vmatprep.subr.mxu0 0.0
    %100 = vmatpush2.msra.mxu0 0.0
    %101 = vmatprep.subr.mxu0 0.0
    %102 = vmatpush2.msra.mxu0 0.0
    %103 = vmatprep.subr.mxu0 0.0
    %104 = vmatpush2.msra.mxu0 0.0
    %105 = vmatprep.mubr.f32.mxu0 0.0
    %106 = vmatmul.mubr.f32.gmra.mxu0 %v36
    %v107 = vpop.f32.mrf.mxu0
    %v108 = vadd.f32 %v32, %v107
    %v109 = vpop.f32.mrf.mxu0
    %110 = vmatprep.mubr.f32.mxu0 0.0
    %111 = vmatmul.mubr.f32.gmra.mxu0 %v39
    %v112 = vpop.f32.mrf.mxu0
    %v113 = vadd.f32 %v32, %v112
    %v114 = vpop.f32.mrf.mxu0
    %115 = vdwg.mxu0
    %v116 = vmul.f32 %v108, %v108
    %v117 = vmul.f32 %v113, %v113
    %v118 = vmul.f32 %v116, 0.044715
    %v119 = vmul.f32 %v117, 0.044715
    %v120 = vadd.f32 %v118, 1.0
    %v121 = vadd.f32 %v119, 1.0
    %v122 = vmul.f32 %v108, %v120
    %v123 = vmul.f32 %v113, %v121
    %v124 = vmul.f32 %v108, 0.5
    %v125 = vmul.f32 %v113, 0.5
    %v126 = vmul.f32 %v122, 0.7978846
    %v127 = vmul.f32 %v123, 0.7978846
    %v128 = vtanh.pop %v126
    %v129 = vtanh.pop %v127
    %v130 = vadd.f32 %v128, 1.0
    %v131 = vadd.f32 %v129, 1.0
    %v132 = vmul.f32 %v124, %v130
    %v133 = vmul.f32 %v125, %v131
    %v134 = vld [vmem:[%s3] sm:$0xff]
    %v135 = vld [vmem:[%s3 + $0x8] sm:$0xff]
    %v136 = vld [vmem:[%s3 + $0x10] sm:$0xff]
    %v137 = vld [vmem:[%s3 + $0x18] sm:$0xff]
    %v138 = vld [vmem:[%s3 + $0x20] sm:$0xff]
    %v139 = vld [vmem:[%s3 + $0x28] sm:$0xff]
    %v140 = vld [vmem:[%s3 + $0x30] sm:$0xff]
    %v141 = vld [vmem:[%s3 + $0x38] sm:$0xff]
    %v142 = vld [vmem:[%s3 + $0x40] sm:$0xff]
    %v143 = vld [vmem:[%s3 + $0x48] sm:$0xff]
    %v144 = vld [vmem:[%s3 + $0x50] sm:$0xff]
    %v145 = vld [vmem:[%s3 + $0x58] sm:$0xff]
    %v146 = vld [vmem:[%s3 + $0x60] sm:$0xff]
    %v147 = vld [vmem:[%s3 + $0x68] sm:$0xff]
    %v148 = vld [vmem:[%s3 + $0x70] sm:$0xff]
    %v149 = vld [vmem:[%s3 + $0x78] sm:$0xff]
    %v150 = vld [vmem:[%s4] sm:$0x1]
    %v152 = vlaneseq
    %v153 = vshrl.u32 %v152, 7
    %v154 = vsub.s32 0, %v153
    %v155 = vrot.slane %v150, %v154
    %157 = vmatprep.subr.mxu0 0.0
    %158 = vmatpush1.msra.mxu0 %v149
    %159 = vmatprep.subr.mxu0 0.0
    %160 = vmatpush1.msra.mxu0 %v148
    %161 = vmatprep.subr.mxu0 0.0
    %162 = vmatpush1.msra.mxu0 %v147
    %163 = vmatprep.subr.mxu0 0.0
    %164 = vmatpush1.msra.mxu0 %v146
    %165 = vmatprep.subr.mxu0 0.0
    %166 = vmatpush1.msra.mxu0 %v145
    %167 = vmatprep.subr.mxu0 0.0
    %168 = vmatpush1.msra.mxu0 %v144
    %169 = vmatprep.subr.mxu0 0.0
    %170 = vmatpush1.msra.mxu0 %v143
    %171 = vmatprep.subr.mxu0 0.0
    %172 = vmatpush1.msra.mxu0 %v142
    %173 = vmatprep.subr.mxu0 0.0
    %174 = vmatpush1.msra.mxu0 %v141
    %175 = vmatprep.subr.mxu0 0.0
    %176 = vmatpush1.msra.mxu0 %v140
    %177 = vmatprep.subr.mxu0 0.0
    %178 = vmatpush1.msra.mxu0 %v139
    %179 = vmatprep.subr.mxu0 0.0
    %180 = vmatpush1.msra.mxu0 %v138
    %181 = vmatprep.subr.mxu0 0.0
    %182 = vmatpush1.msra.mxu0 %v137
    %183 = vmatprep.subr.mxu0 0.0
    %184 = vmatpush1.msra.mxu0 %v136
    %185 = vmatprep.subr.mxu0 0.0
    %186 = vmatpush1.msra.mxu0 %v135
    %187 = vmatprep.subr.mxu0 0.0
    %188 = vmatpush1.msra.mxu0 %v134
    %189 = vmatprep.subr.mxu0 0.0
    %190 = vmatpush2.msra.mxu0 0.0
    %191 = vmatprep.subr.mxu0 0.0
    %192 = vmatpush2.msra.mxu0 0.0
    %193 = vmatprep.subr.mxu0 0.0
    %194 = vmatpush2.msra.mxu0 0.0
    %195 = vmatprep.subr.mxu0 0.0
    %196 = vmatpush2.msra.mxu0 0.0
    %197 = vmatprep.subr.mxu0 0.0
    %198 = vmatpush2.msra.mxu0 0.0
    %199 = vmatprep.subr.mxu0 0.0
    %200 = vmatpush2.msra.mxu0 0.0
    %201 = vmatprep.subr.mxu0 0.0
    %202 = vmatpush2.msra.mxu0 0.0
    %203 = vmatprep.subr.mxu0 0.0
    %204 = vmatpush2.msra.mxu0 0.0
    %205 = vmatprep.subr.mxu0 0.0
    %206 = vmatpush2.msra.mxu0 0.0
    %207 = vmatprep.subr.mxu0 0.0
    %208 = vmatpush2.msra.mxu0 0.0
    %209 = vmatprep.subr.mxu0 0.0
    %210 = vmatpush2.msra.mxu0 0.0
    %211 = vmatprep.subr.mxu0 0.0
    %212 = vmatpush2.msra.mxu0 0.0
    %213 = vmatprep.subr.mxu0 0.0
    %214 = vmatpush2.msra.mxu0 0.0
    %215 = vmatprep.subr.mxu0 0.0
    %216 = vmatpush2.msra.mxu0 0.0
    %217 = vmatprep.subr.mxu0 0.0
    %218 = vmatpush2.msra.mxu0 0.0
    %219 = vmatprep.subr.mxu0 0.0
    %220 = vmatpush2.msra.mxu0 0.0
    %221 = vmatprep.mubr.f32.mxu0 0.0
    %222 = vmatmul.mubr.f32.gmra.mxu0 %v132
    %v223 = vpop.f32.mrf.mxu0
    %v224 = vadd.f32 %v155, %v223
    %v225 = vpop.f32.mrf.mxu0
    %226 = vmatprep.mubr.f32.mxu0 0.0
    %227 = vmatmul.mubr.f32.gmra.mxu0 %v133
    %v228 = vpop.f32.mrf.mxu0
    %v229 = vadd.f32 %v155, %v228
    %v230 = vpop.f32.mrf.mxu0
    %231 = vdwg.mxu0
    %232 = vst.msk [vmem:[#allocation2] sm:$0xff] %vm34, %v224
    %233 = vst.msk [vmem:[#allocation2 + $0x8] sm:$0xff] %vm34, %v229
    // Predicated region
    $region22: #{_ffn_call.1} parent=1 // pred_check
      _
    $region23: #{_ffn_call.1} parent=1 // pred_check_branch
      %235 = sbr.rel (0) target = $region25
    $region24: #{_ffn_call.1} parent=1 // pred_region
      %s237 = ssub.s32 256, 256
      %238 = vsyncadd [#allocation3], %s237
      %s239 = sshll.u32 [#allocation2], 4
      %s240 = int_to_ptr.vmem [resolvable:$true] %s239
      %245 = dma.vmem_to_hbm [thread:$0]  %s240, 256, %s5, [#allocation3], 128, 128, 8
    $region25: #{_ffn_call.1} parent=1 // pred_fallthru
      _
    // Predicated region
    $region26: #{_ffn_call.1} parent=1 // pred_check
      _
    $region27: #{_ffn_call.1} parent=1 // pred_check_branch
      %247 = sbr.rel (0) target = $region29
    $region28: #{_ffn_call.1} parent=1 // pred_region
      %248 = dma.done [#allocation3], 256
    $region29: #{_ffn_call.1} parent=1 // pred_fallthru
      _
    %249 = vsyncpa [#allocation3], 1

</llo_original>
